<compile_context>
chip_gen: v5e
topology: v5e:2x2
jax: 0.10.0
libtpu: 0.0.40
codegen_flags: <defaults>
</compile_context>

<pallas_src>
import functools

import jax
import jax.numpy as jnp
from jax.experimental import pallas as pl
from jax.experimental.pallas import tpu as pltpu


# --------------------------------------------------------------------------- #
# helpers
# --------------------------------------------------------------------------- #
def _round_up(x, m):
    return (x + m - 1) // m * m


def _sublane(dtype):
    # rows packed per vreg sublane group: 8 for 4-byte, 16 for 2-byte, 32 for 1-byte
    return {4: 8, 2: 16, 1: 32}.get(jnp.dtype(dtype).itemsize, 8)


def _pick_tile(padded_dim, max_tile, align=128):
    """Largest multiple of `align` that divides `padded_dim` and is <= max_tile."""
    best = align
    for t in range(align, padded_dim + 1, align):
        if padded_dim % t == 0 and t <= max_tile:
            best = t
    return best


def _vmem_budget():
    """~75% of this generation's physical VMEM (leaves compiler headroom)."""
    cap = 64 << 20
    try:
        info = pltpu.get_tpu_info()
        cap = int(getattr(info, "vmem_capacity_bytes", cap) or cap)
    except Exception:
        pass
    return (cap * 3) // 4


# --------------------------------------------------------------------------- #
# kernels
# --------------------------------------------------------------------------- #
def _kernel_single_k(x_ref, w_ref, b_ref, o_ref):
    # Whole contraction in one K tile: no accumulator scratch needed.
    x = x_ref[...].astype(w_ref.dtype)               # free VPU cast (no-op if same)
    acc = jnp.einsum("ebk,ekn->ebn", x, w_ref[...],
                     preferred_element_type=jnp.float32)
    o_ref[...] = (acc + b_ref[...]).astype(o_ref.dtype)


def _kernel_multi_k(x_ref, w_ref, b_ref, o_ref, acc_ref):
    k = pl.program_id(3)
    x = x_ref[...].astype(w_ref.dtype)
    part = jnp.einsum("ebk,ekn->ebn", x, w_ref[...],
                      preferred_element_type=jnp.float32)

    @pl.when(k == 0)
    def _first():
        acc_ref[...] = part                           # store, not zero-init + add

    @pl.when(k > 0)
    def _accum():
        acc_ref[...] += part

    @pl.when(k == pl.num_programs(3) - 1)
    def _finalize():
        o_ref[...] = (acc_ref[...] + b_ref[...]).astype(o_ref.dtype)


# --------------------------------------------------------------------------- #
# parameter preparation (call ONCE, outside the training/inference step)
# --------------------------------------------------------------------------- #
def prepare_parallel_linear_params(weights, biases, *, weight_dtype=None):
    """Pad weights to (E, round128(K), round128(N)) and cast to the streamed dtype.

    Hoists the big E*K*N pad+convert HBM pass out of the per-call path.
    Biases are tiny, so they are only cast to f32 here and padded per call.
    """
    E, K, N = weights.shape
    Kp, Np = _round_up(K, 128), _round_up(N, 128)
    wd = weights.dtype if weight_dtype is None else weight_dtype
    w = weights
    if (Kp, Np) != (K, N):
        w = jnp.pad(w, ((0, 0), (0, Kp - K), (0, Np - N)))
    w = w.astype(wd)
    b = jnp.asarray(biases, jnp.float32)
    return w, b


# --------------------------------------------------------------------------- #
# forward
# --------------------------------------------------------------------------- #
@functools.partial(
    jax.jit,
    static_argnames=("out_dtype", "block_b", "block_n", "block_k", "ens_block"),
)
def parallel_linear(inp, w_prepared, biases, *, out_dtype=None,
                    block_b=512, block_n=512, block_k=512, ens_block=None):
    """baddbmm(biases, inp, weights): out[e] = biases[e] + inp[e] @ weights[e].

    `w_prepared`, `biases` come from prepare_parallel_linear_params().
    """
    E, B, K = inp.shape
    Ew, Kp, Np = w_prepared.shape
    Eb_, one, N = biases.shape
    assert Ew == E and Eb_ == E and one == 1, "params/inp ensemble mismatch"
    assert Kp >= K and Np >= N and Kp % 128 == 0 and Np % 128 == 0, \
        "w_prepared must come from prepare_parallel_linear_params"

    compute_dtype = w_prepared.dtype
    out_dtype = inp.dtype if out_dtype is None else jnp.dtype(out_dtype)

    # ---- K / N tiles (divisors of the already-padded dims) ------------------
    tk = _pick_tile(Kp, block_k)
    tn = _pick_tile(Np, block_n)
    grid_k, grid_n = Kp // tk, Np // tn

    # Host-cast x only when it is re-streamed across N tiles; otherwise the
    # cast is fused into the kernel (free VPU op on a single read).
    cast_x_host = (compute_dtype != inp.dtype) and (grid_n > 1)
    x_dtype = compute_dtype if cast_x_host else inp.dtype
    xb = jnp.dtype(x_dtype).itemsize
    wb = jnp.dtype(compute_dtype).itemsize
    ob = jnp.dtype(out_dtype).itemsize

    # ---- ensemble block (divisor of E; prefer >= 2 grid steps along E) ------
    eb_candidates = [d for d in range(min(8, E), 0, -1) if E % d == 0]
    if ens_block is not None:
        if E % ens_block != 0:
            raise ValueError("ens_block must divide ensemble size")
        Eb = ens_block
    else:
        Eb = next((d for d in eb_candidates if E // d >= 2), eb_candidates[0])

    # ---- batch tile: prefer full B (weights streamed from HBM exactly once) -
    sub = _sublane(compute_dtype)
    budget = _vmem_budget()

    def working_set(eb, tb_):
        in_out = (eb * tb_ * tk * xb        # x block
                  + eb * tk * tn * wb       # w block
                  + eb * tn * 4             # bias block (f32)
                  + eb * tb_ * tn * ob)     # out block
        acc = eb * tb_ * tn * 4 if grid_k > 1 else 0
        return 2 * in_out + acc             # double-buffered in/out + resident acc

    full_tb = _round_up(B, sub)
    max_tb = min(_round_up(block_b, sub), full_tb)
    tb_cands = [full_tb] if full_tb <= 4096 else []
    t = max_tb
    while t >= sub:
        if t not in tb_cands:
            tb_cands.append(t)
        if t == sub:
            break
        t = max(sub, _round_up(t // 2, sub))

    tb = None
    for cand in tb_cands:
        if working_set(Eb, cand) <= budget:
            tb = cand
            break
    if tb is None:
        for eb2 in eb_candidates:
            if eb2 < Eb and working_set(eb2, sub) <= budget:
                Eb, tb = eb2, sub
                break
    if tb is None:
        tb = sub  # fall back; vmem_limit below still caps the compiler

    Bp = _round_up(B, tb)
    grid_b = Bp // tb

    # ---- megacore guard: keep >= 2 parallel grid steps when possible --------
    if (E // Eb) * grid_b * grid_n < 2 and E > 1:
        Eb = next((d for d in eb_candidates if E // d >= 2), Eb)
    grid_e = E // Eb

    # ---- pad / cast the (small) per-call operands ----------------------------
    x = inp
    if (Bp, Kp) != (B, K):
        x = jnp.pad(x, ((0, 0), (0, Bp - B), (0, Kp - K)))
    if cast_x_host:
        x = x.astype(compute_dtype)

    b = biases
    if Np != N:
        b = jnp.pad(b, ((0, 0), (0, 0), (0, Np - N)))
    b = b.astype(jnp.float32)

    # ---- VMEM limit & cost estimate ------------------------------------------
    vmem_limit = int(min(budget, max(working_set(Eb, tb) + (4 << 20), 16 << 20)))
    cost = pl.CostEstimate(
        flops=2 * E * Bp * Kp * Np,
        transcendentals=0,
        bytes_accessed=int(E * Bp * Kp * xb * grid_n      # x re-read per N tile
                           + E * Kp * Np * wb * grid_b    # w re-read per B tile
                           + E * Np * 4 * grid_b
                           + E * Bp * Np * ob),
    )

    grid = (grid_e, grid_b, grid_n, grid_k)
    multi_k = grid_k > 1
    kernel = _kernel_multi_k if multi_k else _kernel_single_k
    scratch = [pltpu.VMEM((Eb, tb, tn), jnp.float32)] if multi_k else []

    out = pl.pallas_call(
        kernel,
        out_shape=jax.ShapeDtypeStruct((E, Bp, Np), out_dtype),
        grid_spec=pltpu.PrefetchScalarGridSpec(
            num_scalar_prefetch=0,
            grid=grid,
            in_specs=[
                pl.BlockSpec((Eb, tb, tk), lambda e, bi, n, k: (e, bi, k)),
                pl.BlockSpec((Eb, tk, tn), lambda e, bi, n, k: (e, k, n)),
                pl.BlockSpec((Eb, 1, tn), lambda e, bi, n, k: (e, 0, n)),
            ],
            out_specs=pl.BlockSpec((Eb, tb, tn), lambda e, bi, n, k: (e, bi, n)),
            scratch_shapes=scratch,
        ),
        compiler_params=pltpu.CompilerParams(
            dimension_semantics=("parallel", "parallel", "parallel", "arbitrary"),
            vmem_limit_bytes=vmem_limit,
        ),
        cost_estimate=cost,
    )(x, w_prepared, b)

    if (Bp, Np) != (B, N):
        out = out[:, :B, :N]
    return out


# --------------------------------------------------------------------------- #
# module-equivalent init
# --------------------------------------------------------------------------- #
def init_parallel_linear_params(key, n_in, n_out, ensemble_size):
    """Matches the PyTorch module: orthogonal weights, zero biases."""
    ortho = jax.nn.initializers.orthogonal()
    keys = jax.random.split(key, ensemble_size)
    weights = jnp.stack([ortho(k, (n_in, n_out), jnp.float32) for k in keys])
    biases = jnp.zeros((ensemble_size, 1, n_out), jnp.float32)
    return weights, biases


# --------------------------------------------------------------------------- #
# demo / self-test
# --------------------------------------------------------------------------- #
if __name__ == "__main__":
    key = jax.random.PRNGKey(0)
    k_param, k_inp, k_w2, k_b2, k_inp2 = jax.random.split(key, 5)

    # ---- test 1: module-sized shapes, default f32 path (tight tolerance) ----
    ensemble_size, batch, n_in, n_out = 4, 8, 32, 32
    weights, biases = init_parallel_linear_params(k_param, n_in, n_out, ensemble_size)
    inp = jax.random.normal(k_inp, (ensemble_size, batch, n_in), jnp.float32)

    w_prep, b_prep = prepare_parallel_linear_params(weights, biases)  # f32, once
    out = parallel_linear(inp, w_prep, b_prep)
    jax.block_until_ready(out)

    ref = biases + jnp.einsum("ebi,eio->ebo", inp, weights)
    assert out.shape == (ensemble_size, batch, n_out)
    assert jnp.allclose(out, ref, atol=1e-5), "f32 mismatch vs reference"

    # ---- test 2: multi-K accumulation + bf16 weight streaming + N padding ---
    E2, B2, K2, N2 = 4, 8, 256, 160
    w2 = jax.random.normal(k_w2, (E2, K2, N2), jnp.float32) * 0.1
    b2 = jax.random.normal(k_b2, (E2, 1, N2), jnp.float32) * 0.1
    inp2 = jax.random.normal(k_inp2, (E2, B2, K2), jnp.float32)

    w2_prep, b2_prep = prepare_parallel_linear_params(w2, b2, weight_dtype=jnp.bfloat16)
    out2 = parallel_linear(inp2, w2_prep, b2_prep, block_k=128, block_n=128)
    jax.block_until_ready(out2)

    ref2 = b2 + jnp.einsum(
        "ebi,eio->ebo",
        inp2.astype(jnp.bfloat16).astype(jnp.float32),
        w2.astype(jnp.bfloat16).astype(jnp.float32))
    assert out2.shape == (E2, B2, N2)
    assert jnp.allclose(out2, ref2, atol=1e-2, rtol=1e-2), "bf16 mismatch vs reference"

    print("KERNEL_OK")
</pallas_src>

<mosaic_0001>
module attributes {stable_mosaic.version = 11 : i64} {
  func.func @_kernel_single_k(%arg0: i32, %arg1: i32, %arg2: i32, %arg3: i32, %arg4: memref<2x8x128xf32, #tpu.memory_space<vmem>>, %arg5: memref<2x128x128xf32, #tpu.memory_space<vmem>>, %arg6: memref<2x1x128xf32, #tpu.memory_space<vmem>>, %arg7: memref<2x8x128xf32, #tpu.memory_space<vmem>>) attributes {dimension_semantics = [#tpu.dimension_semantics<parallel>, #tpu.dimension_semantics<parallel>, #tpu.dimension_semantics<parallel>, #tpu.dimension_semantics<arbitrary>], iteration_bounds = array<i64: 2, 1, 1, 1>, scalar_prefetch = 0 : i64, scratch_operands = 0 : i64, tpu.core_type = #tpu.core_type<tc>, window_params = [{transform_indices = @transform_0, window_bounds = array<i64: 2, 8, 128>}, {transform_indices = @transform_1, window_bounds = array<i64: 2, 128, 128>}, {transform_indices = @transform_2, window_bounds = array<i64: 2, 1, 128>}, {transform_indices = @transform_3, window_bounds = array<i64: 2, 8, 128>}]} {
    %c0 = arith.constant 0 : index
    %c0_0 = arith.constant 0 : index
    %c0_1 = arith.constant 0 : index
    %0 = vector.load %arg4[%c0, %c0_0, %c0_1] : memref<2x8x128xf32, #tpu.memory_space<vmem>>, vector<2x8x128xf32>
    %c0_2 = arith.constant 0 : index
    %c0_3 = arith.constant 0 : index
    %c0_4 = arith.constant 0 : index
    %1 = vector.load %arg5[%c0_2, %c0_3, %c0_4] : memref<2x128x128xf32, #tpu.memory_space<vmem>>, vector<2x128x128xf32>
    "tpu.trace_start"() <{level = 10 : i32, message = "ebk,ekn->ebn"}> : () -> ()
    %cst = arith.constant dense<0.000000e+00> : vector<2x8x128xf32>
    %2 = tpu.matmul %0, %1, %cst {dimension_numbers = #tpu.dot_dimension_numbers<[2], [1], [1], [2], [0, 0, 0, 1, 1, 2], [0], [0]>} : vector<2x8x128xf32>, vector<2x128x128xf32>, vector<2x8x128xf32> -> vector<2x8x128xf32>
    "tpu.trace_stop"() : () -> ()
    %c0_5 = arith.constant 0 : index
    %c0_6 = arith.constant 0 : index
    %c0_7 = arith.constant 0 : index
    %3 = vector.load %arg6[%c0_5, %c0_6, %c0_7] : memref<2x1x128xf32, #tpu.memory_space<vmem>>, vector<2x1x128xf32>
    %4 = vector.broadcast %3 : vector<2x1x128xf32> to vector<2x8x128xf32>
    %5 = arith.addf %2, %4 : vector<2x8x128xf32>
    %c0_8 = arith.constant 0 : index
    %c0_9 = arith.constant 0 : index
    %c0_10 = arith.constant 0 : index
    %6 = vector.load %arg7[%c0_8, %c0_9, %c0_10] : memref<2x8x128xf32, #tpu.memory_space<vmem>>, vector<2x8x128xf32>
    tpu.vector_store %arg7[%c0_8, %c0_9, %c0_10], %5 {strides = array<i32>} : memref<2x8x128xf32, #tpu.memory_space<vmem>>, vector<2x8x128xf32>,
    return
  }
  func.func @transform_0(%arg0: i32, %arg1: i32, %arg2: i32, %arg3: i32) -> (i32, i32, i32) {
    %c0_i32 = arith.constant 0 : i32
    return %arg0, %arg1, %arg3 : i32, i32, i32
  }
  func.func @transform_1(%arg0: i32, %arg1: i32, %arg2: i32, %arg3: i32) -> (i32, i32, i32) {
    %c0_i32 = arith.constant 0 : i32
    return %arg0, %arg3, %arg2 : i32, i32, i32
  }
  func.func @transform_2(%arg0: i32, %arg1: i32, %arg2: i32, %arg3: i32) -> (i32, i32, i32) {
    %c0_i32 = arith.constant 0 : i32
    %c0_i32_0 = arith.constant 0 : i32
    return %arg0, %c0_i32, %arg2 : i32, i32, i32
  }
  func.func @transform_3(%arg0: i32, %arg1: i32, %arg2: i32, %arg3: i32) -> (i32, i32, i32) {
    %c0_i32 = arith.constant 0 : i32
    return %arg0, %arg1, %arg2 : i32, i32, i32
  }
}

</mosaic_0001>

<llo_original>
// kernel: parallel_linear.1
$region0: #{parallel_linear.1}
  #allocation0 [shape = 'u32[]', space=smem, size = 0x4, offset = 0x4, fixed_abs, tag = 'smem constant byte address 0x4 - core index']
  #allocation1 [shape = 'u32[72,128]{1,0:T(1,128)}', space=vmem, size = 0x9000, scoped, tag = 'internal scratch']
  %s0 = inlined_call_operand.vmem [shape: f32[4,8,128], index: 0, kind: input, shape index: {}]
  %s1 = inlined_call_operand.hbm [shape: f32[4,128,128], index: 1, kind: input, shape index: {}]
  %s2 = inlined_call_operand.vmem [shape: f32[4,1,128], index: 2, kind: input, shape index: {}]
  %s3 = inlined_call_operand.hbm [shape: f32[4,8,128], index: 3, kind: output, shape index: {}]
  %s4 = sld [smem:[#allocation0]]
  $region49: #{parallel_linear.1} parent=0
    _
  %s6 = ssub.s32 1, %s4
  %s7 = scalar_select 0, %s6, %s4
  $region1: #{parallel_linear.1} parent=0
    #allocation2 [shape = 'u8[262144]{0}', space=vmem, size = 0x40000, scoped, tag = 'input window, operand 1']
    #allocation3 [shape = 's32[2]{0}', space=sflag, size = 0x8, scoped, tag = 'scoped memory for parallel_linear.1']
    #allocation4 [shape = 's32[2]{0}', space=sflag, size = 0x8, scoped, tag = 'scoped memory for parallel_linear.1']
    #allocation5 [shape = 'u8[16384]{0}', space=vmem, size = 0x4000, scoped, tag = 'output window, operand 0']
    %8 = vsyncpa [#allocation3], 0
    %s9 = scalar_lea.sflag [#allocation3], 1
    %10 = vsyncpa %s9, 0
    %11 = vsyncpa [#allocation4], 0
    %s12 = scalar_lea.sflag [#allocation4], 1
    %13 = vsyncpa %s12, 0
    loop: start=0, step=1, limit=4
    $region2: #{parallel_linear.1} parent=1 // loop_pre_header
      _
    $region3: #{parallel_linear.1} parent=1 // loop_header
      %s15 = sphi 0, %s19
      %p16 = scmp.ge.s32.totalorder %s15, 4
      %s22 = sphi 0, %s48
      %s23 = sphi 0, %s44
      %s24 = sphi 0, %s40
      %s25 = sphi 0, %s36
      %s26 = sphi 0, %s22
      %s27 = sphi 0, %s23
      %s28 = sphi 0, %s24
      %s29 = sphi 0, %s25
      %s30 = sphi 0, %s26
      %s31 = sphi 0, %s27
      %s32 = sphi 0, %s28
      %s33 = sphi 0, %s29
      %s55 = sphi 0, %s57
      %s58 = sphi 0, %s55
      %s59 = sphi 0, %s58
      %s75 = sphi 0, %s59
      %s85 = sphi 0, %s87
      %s88 = sphi 0, %s85
      %s89 = sphi 0, %s88
      %s105 = sphi 0, %s89
      %s113 = sphi 0, %s115
      %s116 = sphi 0, %s113
      %s117 = sphi 0, %s116
      %s133 = sphi 0, %s117
      %s143 = sphi 0, %s145
      %s146 = sphi 0, %s143
      %s147 = sphi 0, %s146
      %s163 = sphi 0, %s147
    $region4: #{parallel_linear.1} parent=1 // loop_header_branch
      %18 = sbr.rel (%p16) target = $region8
    $region5: #{parallel_linear.1} parent=1 // loop_body
      %s20 = ssub.s32 %s15, 1
      %s21 = ssub.s32 %s15, 2
      %s34 = sadd.s32 1, %s25
      %p35 = scmp.ge.s32.totalorder %s34, 1
      %s36 = scalar_select %p35, 0, %s34
      %s37 = sadd.s32 1, %s24
      %s38 = scalar_select %p35, %s37, %s24
      %p39 = scmp.ge.s32.totalorder %s38, 1
      %s40 = scalar_select %p39, 0, %s38
      %s41 = sadd.s32 1, %s23
      %s42 = scalar_select %p39, %s41, %s23
      %p43 = scmp.ge.s32.totalorder %s42, 1
      %s44 = scalar_select %p43, 0, %s42
      %s45 = sadd.s32 1, %s22
      %s46 = scalar_select %p43, %s45, %s22
      %p47 = scmp.ge.s32.totalorder %s46, 2
      %s48 = scalar_select %p47, 0, %s46
      %s49 = ssub.s32 %s22, %s48
      %s50 = ssub.s32 %s23, %s44
      %s51 = sor.u32 %s49, %s50
      %s52 = ssub.s32 %s25, %s36
      %s53 = sor.u32 %s51, %s52
      %p54 = scmp.eq.s32.totalorder %s53, 0
      %s56 = sadd.s32 %s55, 1
      %s57 = scalar_select %p54, %s55, %s56
      %p60 = pneg %p54
      %p61 = scmp.eq.s32.totalorder %s15, 1
      %p62 = por %p60, %p61
      %p63 = scmp.ne.s32.totalorder %s55, %s58
      %p64 = scmp.eq.s32.totalorder %s15, 0
      %p65 = por %p63, %p64
      %p66 = scmp.ne.s32.totalorder %s55, %s58
      %p67 = scmp.eq.s32.totalorder %s20, 1
      %p68 = por %p66, %p67
      %p69 = scmp.ne.s32.totalorder %s58, %s59
      %p70 = scmp.eq.s32.totalorder %s20, 0
      %p71 = por %p69, %p70
      %p72 = scmp.ne.s32.totalorder %s58, %s59
      %p73 = scmp.eq.s32.totalorder %s21, 1
      %p74 = por %p72, %p73
      %p76 = scmp.ne.s32.totalorder %s59, %s75
      %p77 = scmp.eq.s32.totalorder %s21, 0
      %p78 = por %p76, %p77
      %s79 = ssub.s32 %s22, %s48
      %s80 = ssub.s32 %s25, %s36
      %s81 = sor.u32 %s79, %s80
      %s82 = ssub.s32 %s24, %s40
      %s83 = sor.u32 %s81, %s82
      %p84 = scmp.eq.s32.totalorder %s83, 0
      %s86 = sadd.s32 %s85, 1
      %s87 = scalar_select %p84, %s85, %s86
      %p90 = pneg %p84
      %p91 = scmp.eq.s32.totalorder %s15, 1
      %p92 = por %p90, %p91
      %p93 = scmp.ne.s32.totalorder %s85, %s88
      %p94 = scmp.eq.s32.totalorder %s15, 0
      %p95 = por %p93, %p94
      %p96 = scmp.ne.s32.totalorder %s85, %s88
      %p97 = scmp.eq.s32.totalorder %s20, 1
      %p98 = por %p96, %p97
      %p99 = scmp.ne.s32.totalorder %s88, %s89
      %p100 = scmp.eq.s32.totalorder %s20, 0
      %p101 = por %p99, %p100
      %p102 = scmp.ne.s32.totalorder %s88, %s89
      %p103 = scmp.eq.s32.totalorder %s21, 1
      %p104 = por %p102, %p103
      %p106 = scmp.ne.s32.totalorder %s89, %s105
      %p107 = scmp.eq.s32.totalorder %s21, 0
      %p108 = por %p106, %p107
      %s109 = ssub.s32 %s22, %s48
      %s110 = ssub.s32 %s24, %s40
      %s111 = sor.u32 %s109, %s110
      %p112 = scmp.eq.s32.totalorder %s111, 0
      %s114 = sadd.s32 %s113, 1
      %s115 = scalar_select %p112, %s113, %s114
      %p118 = pneg %p112
      %p119 = scmp.eq.s32.totalorder %s15, 1
      %p120 = por %p118, %p119
      %p121 = scmp.ne.s32.totalorder %s113, %s116
      %p122 = scmp.eq.s32.totalorder %s15, 0
      %p123 = por %p121, %p122
      %p124 = scmp.ne.s32.totalorder %s113, %s116
      %p125 = scmp.eq.s32.totalorder %s20, 1
      %p126 = por %p124, %p125
      %p127 = scmp.ne.s32.totalorder %s116, %s117
      %p128 = scmp.eq.s32.totalorder %s20, 0
      %p129 = por %p127, %p128
      %p130 = scmp.ne.s32.totalorder %s116, %s117
      %p131 = scmp.eq.s32.totalorder %s21, 1
      %p132 = por %p130, %p131
      %p134 = scmp.ne.s32.totalorder %s117, %s133
      %p135 = scmp.eq.s32.totalorder %s21, 0
      %p136 = por %p134, %p135
      %s137 = ssub.s32 %s22, %s48
      %s138 = ssub.s32 %s23, %s44
      %s139 = sor.u32 %s137, %s138
      %s140 = ssub.s32 %s24, %s40
      %s141 = sor.u32 %s139, %s140
      %p142 = scmp.eq.s32.totalorder %s141, 0
      %s144 = sadd.s32 %s143, 1
      %s145 = scalar_select %p142, %s143, %s144
      %p148 = pneg %p142
      %p149 = scmp.eq.s32.totalorder %s15, 1
      %p150 = por %p148, %p149
      %p151 = scmp.ne.s32.totalorder %s143, %s146
      %p152 = scmp.eq.s32.totalorder %s15, 0
      %p153 = por %p151, %p152
      %p154 = scmp.ne.s32.totalorder %s143, %s146
      %p155 = scmp.eq.s32.totalorder %s20, 1
      %p156 = por %p154, %p155
      %p157 = scmp.ne.s32.totalorder %s146, %s147
      %p158 = scmp.eq.s32.totalorder %s20, 0
      %p159 = por %p157, %p158
      %p160 = scmp.ne.s32.totalorder %s146, %s147
      %p161 = scmp.eq.s32.totalorder %s21, 1
      %p162 = por %p160, %p161
      %p164 = scmp.ne.s32.totalorder %s147, %s163
      %p165 = scmp.eq.s32.totalorder %s21, 0
      %p166 = por %p164, %p165
      %p167 = scmp.le.s32.totalorder 1, %s15
      %p168 = scmp.lt.s32.totalorder %s15, 3
      %p169 = pnand %p167, %p168
      %p170 = pneg %p169
      // Predicated region
      $region9: #{parallel_linear.1} parent=5 // pred_check
        _
      $region10: #{parallel_linear.1} parent=5 // pred_check_branch
        %172 = sbr.rel (%p169) target = $region12
      $region11: #{parallel_linear.1} parent=5 // pred_region
        %s173 = ssub.s32 %s15, 1
      $region12: #{parallel_linear.1} parent=5 // pred_fallthru
        _
      %p174 = scmp.lt.s32.totalorder %s15, 2
      // Predicated region
      $region13: #{parallel_linear.1} parent=5 // pred_check
        %p175 = pneg %p174
      $region14: #{parallel_linear.1} parent=5 // pred_check_branch
        %177 = sbr.rel (%p175) target = $region16
      $region15: #{parallel_linear.1} parent=5 // pred_region
        // Predicated region
        $region17: #{parallel_linear.1} parent=15 // pred_check
          %p178 = pneg %p65
        $region18: #{parallel_linear.1} parent=15 // pred_check_branch
          %180 = sbr.rel (%p178) target = $region20
        $region19: #{parallel_linear.1} parent=15 // pred_region
          %s181 = smul.u32 2, %s22
          %p182 = scmp.lt.s32.totalorder %s181, 3
          %s183 = scalar_select %p182, %s181, 3
          %p184 = scmp.lt.s32.totalorder %s23, 0
          %s185 = scalar_select %p184, %s23, 0
          %p186 = scmp.lt.s32.totalorder %s25, 0
          %s187 = scalar_select %p186, %s25, 0
          %s188 = sadd.s32 %s187, %s185
          %s189 = sadd.s32 %s188, %s183
          %s190 = smul.addr %s189, 8
          %s191 = scalar_lea.vmem %s0, %s190
          %s192 = smul.u32 2, %s22
        $region20: #{parallel_linear.1} parent=15 // pred_fallthru
          _
        // Predicated region
        $region21: #{parallel_linear.1} parent=15 // pred_check
          %p193 = pneg %p95
        $region22: #{parallel_linear.1} parent=15 // pred_check_branch
          %195 = sbr.rel (%p193) target = $region24
        $region23: #{parallel_linear.1} parent=15 // pred_region
          %s196 = sand.u32 %s85, 1
          %s197 = scalar_lea.sflag [#allocation3], %s196
          %s198 = sand.u32 %s85, 1
          %s199 = smul.addr %s198, 256
          %s200 = scalar_lea.vmem [#allocation2], %s199
          %s201 = smul.u32 2, %s22
          %s202 = smul.u32 16, %s25
          %204 = vsyncadd %s197, 0
          %s205 = sadd.s32 %s24, %s202
          %s206 = smul.addr %s201, 16
          %s207 = sadd.s32 %s205, %s206
          %s208 = smul.addr %s207, 8
          %s209 = scalar_lea.hbm %s1, %s208
          %s210 = sshll.u32 %s209, 4
          %s211 = int_to_ptr.hbm [resolvable:$true] %s210
          %s212 = sshll.u32 %s200, 4
          %s213 = int_to_ptr.vmem [resolvable:$true] %s212
          %218 = dma.hbm_to_vmem [thread:$0]  %s211, 4096, %s213, %s197, 128, 128, 8
        $region24: #{parallel_linear.1} parent=15 // pred_fallthru
          _
        // Predicated region
        $region25: #{parallel_linear.1} parent=15 // pred_check
          %p219 = pneg %p123
        $region26: #{parallel_linear.1} parent=15 // pred_check_branch
          %221 = sbr.rel (%p219) target = $region28
        $region27: #{parallel_linear.1} parent=15 // pred_region
          %s222 = smul.u32 2, %s22
          %p223 = scmp.lt.s32.totalorder %s222, 3
          %s224 = scalar_select %p223, %s222, 3
          %p225 = scmp.lt.s32.totalorder %s24, 0
          %s226 = scalar_select %p225, %s24, 0
          %s227 = sadd.s32 %s226, %s224
          %s228 = scalar_lea.vmem %s2, %s227
          %s229 = smul.u32 2, %s22
        $region28: #{parallel_linear.1} parent=15 // pred_fallthru
          _
      $region16: #{parallel_linear.1} parent=5 // pred_fallthru
        _
      %p230 = scmp.le.s32.totalorder 1, %s15
      %p231 = scmp.lt.s32.totalorder %s15, 3
      %p232 = pnand %p230, %p231
      %p233 = pneg %p232
      // Predicated region
      $region29: #{parallel_linear.1} parent=5 // pred_check
        _
      $region30: #{parallel_linear.1} parent=5 // pred_check_branch
        %235 = sbr.rel (%p232) target = $region32
      $region31: #{parallel_linear.1} parent=5 // pred_region
        %s236 = ssub.s32 %s15, 1
        %s237 = sand.u32 %s88, 1
        %s238 = scalar_lea.sflag [#allocation3], %s237
        %s239 = sand.u32 %s88, 1
        %s240 = smul.addr %s239, 256
        %s241 = scalar_lea.vmem [#allocation2], %s240
        // Predicated region
        $region33: #{parallel_linear.1} parent=31 // pred_check
          %p242 = pneg %p101
        $region34: #{parallel_linear.1} parent=31 // pred_check_branch
          %244 = sbr.rel (%p242) target = $region36
        $region35: #{parallel_linear.1} parent=31 // pred_region
          %246 = dma.done %s238, 4096
        $region36: #{parallel_linear.1} parent=31 // pred_fallthru
          _
        %s247 = smul.u32 2, %s26
        %p248 = scmp.lt.s32.totalorder %s247, 3
        %s249 = scalar_select %p248, %s247, 3
        %p250 = scmp.lt.s32.totalorder %s27, 0
        %s251 = scalar_select %p250, %s27, 0
        %p252 = scmp.lt.s32.totalorder %s29, 0
        %s253 = scalar_select %p252, %s29, 0
        %s254 = sadd.s32 %s253, %s251
        %s255 = sadd.s32 %s254, %s249
        %s256 = smul.addr %s255, 8
        %s257 = scalar_lea.vmem %s0, %s256
        %p258 = pneg %p71
        %p259 = pneg %p68
        %s260 = sand.u32 %s88, 1
        %s261 = scalar_lea.sflag [#allocation3], %s260
        %s262 = sand.u32 %s88, 1
        %s263 = smul.addr %s262, 256
        %s264 = scalar_lea.vmem [#allocation2], %s263
        %p265 = pneg %p101
        %p266 = pneg %p98
        %s267 = smul.u32 2, %s26
        %p268 = scmp.lt.s32.totalorder %s267, 3
        %s269 = scalar_select %p268, %s267, 3
        %p270 = scmp.lt.s32.totalorder %s28, 0
        %s271 = scalar_select %p270, %s28, 0
        %s272 = sadd.s32 %s271, %s269
        %s273 = scalar_lea.vmem %s2, %s272
        %p274 = pneg %p129
        %p275 = pneg %p126
        %p276 = pneg %p159
        %p277 = pneg %p156
        %s278 = sand.u32 %s146, 1
        %s279 = scalar_lea.sflag [#allocation4], %s278
        %s280 = sand.u32 %s146, 1
        %s281 = smul.addr %s280, 16
        %s282 = scalar_lea.vmem [#allocation5], %s281
        %s283 = smul.u32 2, %s26
        %p284 = scmp.lt.s32.totalorder %s283, 3
        %s285 = scalar_select %p284, %s283, 3
        %p286 = scmp.lt.s32.totalorder %s27, 0
        %s287 = scalar_select %p286, %s27, 0
        %p288 = scmp.lt.s32.totalorder %s29, 0
        %s289 = scalar_select %p288, %s29, 0
        %s290 = sadd.s32 %s289, %s287
        %s291 = sadd.s32 %s290, %s285
        %s292 = smul.addr %s291, 8
        %s293 = scalar_lea.vmem %s0, %s292
        %s294 = smul.u32 2, %s26
        %s295 = smul.u32 2, %s26
        %s296 = smul.u32 16, %s29
        %s297 = smul.u32 2, %s26
        %p298 = scmp.lt.s32.totalorder %s297, 3
        %s299 = scalar_select %p298, %s297, 3
        %p300 = scmp.lt.s32.totalorder %s28, 0
        %s301 = scalar_select %p300, %s28, 0
        %s302 = sadd.s32 %s301, %s299
        %s303 = scalar_lea.vmem %s2, %s302
        %s304 = smul.u32 2, %s26
        %s305 = smul.u32 2, %s26
        %v306 = vld [vmem:[%s293] sm:$0xff]
        %v307 = vld [vmem:[%s293 + $0x8] sm:$0xff]
        %v308 = vld [vmem:[%s241] sm:$0xff]
        %v309 = vld [vmem:[%s241 + $0x8] sm:$0xff]
        %v310 = vld [vmem:[%s241 + $0x10] sm:$0xff]
        %v311 = vld [vmem:[%s241 + $0x18] sm:$0xff]
        %v312 = vld [vmem:[%s241 + $0x20] sm:$0xff]
        %v313 = vld [vmem:[%s241 + $0x28] sm:$0xff]
        %v314 = vld [vmem:[%s241 + $0x30] sm:$0xff]
        %v315 = vld [vmem:[%s241 + $0x38] sm:$0xff]
        %v316 = vld [vmem:[%s241 + $0x40] sm:$0xff]
        %v317 = vld [vmem:[%s241 + $0x48] sm:$0xff]
        %v318 = vld [vmem:[%s241 + $0x50] sm:$0xff]
        %v319 = vld [vmem:[%s241 + $0x58] sm:$0xff]
        %v320 = vld [vmem:[%s241 + $0x60] sm:$0xff]
        %v321 = vld [vmem:[%s241 + $0x68] sm:$0xff]
        %v322 = vld [vmem:[%s241 + $0x70] sm:$0xff]
        %v323 = vld [vmem:[%s241 + $0x78] sm:$0xff]
        %v324 = vld [vmem:[%s241 + $0x80] sm:$0xff]
        %v325 = vld [vmem:[%s241 + $0x88] sm:$0xff]
        %v326 = vld [vmem:[%s241 + $0x90] sm:$0xff]
        %v327 = vld [vmem:[%s241 + $0x98] sm:$0xff]
        %v328 = vld [vmem:[%s241 + $0xa0] sm:$0xff]
        %v329 = vld [vmem:[%s241 + $0xa8] sm:$0xff]
        %v330 = vld [vmem:[%s241 + $0xb0] sm:$0xff]
        %v331 = vld [vmem:[%s241 + $0xb8] sm:$0xff]
        %v332 = vld [vmem:[%s241 + $0xc0] sm:$0xff]
        %v333 = vld [vmem:[%s241 + $0xc8] sm:$0xff]
        %v334 = vld [vmem:[%s241 + $0xd0] sm:$0xff]
        %v335 = vld [vmem:[%s241 + $0xd8] sm:$0xff]
        %v336 = vld [vmem:[%s241 + $0xe0] sm:$0xff]
        %v337 = vld [vmem:[%s241 + $0xe8] sm:$0xff]
        %v338 = vld [vmem:[%s241 + $0xf0] sm:$0xff]
        %v339 = vld [vmem:[%s241 + $0xf8] sm:$0xff]
        %v340 = vld [vmem:[%s303] sm:$0x1]
        %v341 = vld [vmem:[%s303 + $0x1] sm:$0x1]
        %v344 = vperm.slane %v340, 0
        %v345 = vperm.slane %v341, 0
        %348 = vmatpush.msra.mxu0 %v323
        %349 = vmatpush.msra.mxu0 %v322
        %350 = vmatpush.msra.mxu0 %v321
        %351 = vmatpush.msra.mxu0 %v320
        %352 = vmatpush.msra.mxu0 %v319
        %353 = vmatpush.msra.mxu0 %v318
        %354 = vmatpush.msra.mxu0 %v317
        %355 = vmatpush.msra.mxu0 %v316
        %356 = vmatpush.msra.mxu0 %v315
        %357 = vmatpush.msra.mxu0 %v314
        %358 = vmatpush.msra.mxu0 %v313
        %359 = vmatpush.msra.mxu0 %v312
        %360 = vmatpush.msra.mxu0 %v311
        %361 = vmatpush.msra.mxu0 %v310
        %362 = vmatpush.msra.mxu0 %v309
        %363 = vmatpush.msra.mxu0 %v308
        %364 = vmatmul.f32.gmra.mxu0 %v306
        %v365 = vpop.f32.mrf.mxu0
        %v366 = vadd.f32 %v344, %v365
        %367 = vdwg.mxu0
        %368 = vmatpush.msra.mxu0 %v339
        %369 = vmatpush.msra.mxu0 %v338
        %370 = vmatpush.msra.mxu0 %v337
        %371 = vmatpush.msra.mxu0 %v336
        %372 = vmatpush.msra.mxu0 %v335
        %373 = vmatpush.msra.mxu0 %v334
        %374 = vmatpush.msra.mxu0 %v333
        %375 = vmatpush.msra.mxu0 %v332
        %376 = vmatpush.msra.mxu0 %v331
        %377 = vmatpush.msra.mxu0 %v330
        %378 = vmatpush.msra.mxu0 %v329
        %379 = vmatpush.msra.mxu0 %v328
        %380 = vmatpush.msra.mxu0 %v327
        %381 = vmatpush.msra.mxu0 %v326
        %382 = vmatpush.msra.mxu0 %v325
        %383 = vmatpush.msra.mxu0 %v324
        %384 = vmatmul.f32.gmra.mxu0 %v307
        %v385 = vpop.f32.mrf.mxu0
        %v386 = vadd.f32 %v345, %v385
        %387 = vdwg.mxu0
        %388 = vst [vmem:[%s282] sm:$0xff] %v366
        %389 = vst [vmem:[%s282 + $0x8] sm:$0xff] %v386
        %s390 = sand.u32 %s146, 1
        %s391 = scalar_lea.sflag [#allocation4], %s390
        %s392 = sand.u32 %s146, 1
        %s393 = smul.addr %s392, 16
        %s394 = scalar_lea.vmem [#allocation5], %s393
        // Predicated region
        $region37: #{parallel_linear.1} parent=31 // pred_check
          %p395 = pneg %p156
        $region38: #{parallel_linear.1} parent=31 // pred_check_branch
          %397 = sbr.rel (%p395) target = $region40
        $region39: #{parallel_linear.1} parent=31 // pred_region
          %s398 = smul.u32 2, %s26
          %400 = vsyncadd %s391, 0
          %s401 = sadd.s32 %s28, %s27
          %s402 = sadd.s32 %s401, %s398
          %s403 = smul.addr %s402, 8
          %s404 = scalar_lea.hbm %s3, %s403
          %s405 = sshll.u32 %s394, 4
          %s406 = int_to_ptr.vmem [resolvable:$true] %s405
          %s407 = sshll.u32 %s404, 4
          %s408 = int_to_ptr.hbm [resolvable:$true] %s407
          %413 = dma.vmem_to_hbm [thread:$0]  %s406, 256, %s408, %s391, 128, 128, 8
        $region40: #{parallel_linear.1} parent=31 // pred_fallthru
          _
      $region32: #{parallel_linear.1} parent=5 // pred_fallthru
        _
      %p414 = scmp.le.s32.totalorder 2, %s15
      // Predicated region
      $region41: #{parallel_linear.1} parent=5 // pred_check
        %p415 = pneg %p414
      $region42: #{parallel_linear.1} parent=5 // pred_check_branch
        %417 = sbr.rel (%p415) target = $region44
      $region43: #{parallel_linear.1} parent=5 // pred_region
        %s418 = ssub.s32 %s15, 2
        // Predicated region
        $region45: #{parallel_linear.1} parent=43 // pred_check
          %p419 = pneg %p162
        $region46: #{parallel_linear.1} parent=43 // pred_check_branch
          %421 = sbr.rel (%p419) target = $region48
        $region47: #{parallel_linear.1} parent=43 // pred_region
          %s422 = sand.u32 %s147, 1
          %s423 = scalar_lea.sflag [#allocation4], %s422
          %s424 = sand.u32 %s147, 1
          %s425 = smul.addr %s424, 16
          %s426 = scalar_lea.vmem [#allocation5], %s425
          %428 = dma.done %s423, 256
        $region48: #{parallel_linear.1} parent=43 // pred_fallthru
          _
      $region44: #{parallel_linear.1} parent=5 // pred_fallthru
        _
    $region6: #{parallel_linear.1} parent=1 // loop_footer
      %s19 = sadd.s32 1, %s15
    $region7: #{parallel_linear.1} parent=1 // loop_footer_branch
      %14 = sbr.rel target = $region3
    $region8: #{parallel_linear.1} parent=1 // loop_exit
      _
    %429 = vsyncpa [#allocation3], 1
    %s430 = scalar_lea.sflag [#allocation3], 1
    %431 = vsyncpa %s430, 1
    %432 = vsyncpa [#allocation4], 1
    %s433 = scalar_lea.sflag [#allocation4], 1
    %434 = vsyncpa %s433, 1

</llo_original>
